<compile_context>
chip_gen: v6e
topology: v6e:2x2x1
jax: 0.10.0
libtpu: 0.0.40
codegen_flags: <defaults>
</compile_context>

<pallas_src>
import functools

import jax
import jax.numpy as jnp
from jax.experimental import pallas as pl
from jax.experimental.pallas import tpu as pltpu

IN_FEATURES = 100
IN_PAD = 128          # lane-aligned K
HIDDEN = 64
OUT_FEATURES = 1
LEAKY_SLOPE = 0.02
DEFAULT_TILE_B = 1024


def discriminator_kernel(x_ref, w1_ref, b1_ref, w2_ref, b2_ref, o_ref):
    # Layer 1: Linear(128(padded) -> 64), bf16 inputs, f32 accumulation on MXU.
    x = x_ref[...]                                               # (TILE_B, 128) bf16
    h = jnp.dot(x, w1_ref[...], preferred_element_type=jnp.float32)
    h = h + b1_ref[...]                                          # (1, 64) f32 broadcast
    # LeakyReLU(negative_slope=0.02) in f32 (VPU; v5e has no bf16 VPU anyway).
    h = jnp.where(h > 0, h, LEAKY_SLOPE * h)
    # Layer 2: Linear(64 -> 1) as VPU mul + lane reduction (skip N=1 MXU matmul).
    y = jnp.sum(h * w2_ref[...], axis=-1, keepdims=True) + b2_ref[...]
    # Sigmoid
    o_ref[...] = jax.nn.sigmoid(y).astype(o_ref.dtype)


@functools.partial(jax.jit, static_argnames=("tile_b",))
def discriminator_forward(x, w1, b1, w2, b2, *, tile_b=DEFAULT_TILE_B):
    """x: (B, 100) f32; w1: (100, 64); b1: (1, 64); w2: (64, 1); b2: (1, 1)."""
    B = x.shape[0]

    # Pad K: 100 -> 128 (exact: padded columns/rows are zero) and cast to bf16.
    x_p = jnp.pad(x, ((0, 0), (0, IN_PAD - IN_FEATURES))).astype(jnp.bfloat16)
    w1_p = jnp.pad(w1, ((0, IN_PAD - IN_FEATURES), (0, 0))).astype(jnp.bfloat16)
    w2_row = w2.reshape(1, HIDDEN).astype(jnp.float32)           # (1, 64)
    b1 = b1.astype(jnp.float32)
    b2 = b2.astype(jnp.float32)

    # Batch tiling: round B up to a sublane-aligned tile; pad rows are dropped.
    tb = min(tile_b, ((B + 7) // 8) * 8)
    num_tiles = pl.cdiv(B, tb)
    B_pad = num_tiles * tb
    if B_pad != B:
        x_p = jnp.pad(x_p, ((0, B_pad - B), (0, 0)))

    out = pl.pallas_call(
        discriminator_kernel,
        out_shape=jax.ShapeDtypeStruct((B_pad, OUT_FEATURES), jnp.float32),
        grid=(num_tiles,),
        in_specs=[
            pl.BlockSpec((tb, IN_PAD), lambda i: (i, 0)),            # x tile
            pl.BlockSpec((IN_PAD, HIDDEN), lambda i: (0, 0)),        # w1 (resident)
            pl.BlockSpec((1, HIDDEN), lambda i: (0, 0)),             # b1
            pl.BlockSpec((1, HIDDEN), lambda i: (0, 0)),             # w2 row
            pl.BlockSpec((1, OUT_FEATURES), lambda i: (0, 0)),       # b2
        ],
        out_specs=pl.BlockSpec((tb, OUT_FEATURES), lambda i: (i, 0)),
        compiler_params=pltpu.CompilerParams(
            dimension_semantics=("parallel",)),                      # 2x on v7x dual-TC
    )(x_p, w1_p, b1, w2_row, b2)
    return out[:B]


def init_params(key):
    """Deterministic init mimicking torch.nn.Linear default U[-1/sqrt(fan_in), 1/sqrt(fan_in)]."""
    k1, k2, k3, k4 = jax.random.split(key, 4)
    bound1 = 1.0 / jnp.sqrt(IN_FEATURES)
    bound2 = 1.0 / jnp.sqrt(HIDDEN)
    w1 = jax.random.uniform(k1, (IN_FEATURES, HIDDEN), jnp.float32, -bound1, bound1)
    b1 = jax.random.uniform(k2, (1, HIDDEN), jnp.float32, -bound1, bound1)
    w2 = jax.random.uniform(k3, (HIDDEN, OUT_FEATURES), jnp.float32, -bound2, bound2)
    b2 = jax.random.uniform(k4, (1, OUT_FEATURES), jnp.float32, -bound2, bound2)
    return w1, b1, w2, b2


def reference_forward(x, w1, b1, w2, b2):
    h = x @ w1 + b1
    h = jnp.where(h > 0, h, LEAKY_SLOPE * h)
    y = h @ w2 + b2
    return jax.nn.sigmoid(y)


if __name__ == "__main__":
    key = jax.random.PRNGKey(0)
    k_params, k_x1, k_x2 = jax.random.split(key, 3)
    w1, b1, w2, b2 = init_params(k_params)

    # Small-batch test (single 8-row tile).
    B = 8
    x = jax.random.normal(k_x1, (B, IN_FEATURES), jnp.float32)
    out = jax.block_until_ready(discriminator_forward(x, w1, b1, w2, b2))
    ref = reference_forward(x, w1, b1, w2, b2)
    assert out.shape == (B, OUT_FEATURES)
    # bf16 x/w1 with f32 accumulation vs pure-f32 reference: sigmoid output
    # error is well below 1e-2 for these magnitudes.
    assert jnp.allclose(out, ref, atol=2e-2, rtol=0), "mismatch vs pure-JAX reference (small batch)"

    # Larger, non-multiple batch exercising tiling + padding + row drop.
    B2 = 1500
    x2 = jax.random.normal(k_x2, (B2, IN_FEATURES), jnp.float32)
    out2 = jax.block_until_ready(discriminator_forward(x2, w1, b1, w2, b2, tile_b=512))
    ref2 = reference_forward(x2, w1, b1, w2, b2)
    assert out2.shape == (B2, OUT_FEATURES)
    assert jnp.allclose(out2, ref2, atol=2e-2, rtol=0), "mismatch vs pure-JAX reference (tiled batch)"

    print("KERNEL_OK")
</pallas_src>

<mosaic_0001>
module attributes {stable_mosaic.version = 11 : i64} {
  func.func @discriminator_kernel(%arg0: i32, %arg1: memref<8x128xbf16, #tpu.memory_space<vmem>>, %arg2: memref<128x64xbf16, #tpu.memory_space<vmem>>, %arg3: memref<1x64xf32, #tpu.memory_space<vmem>>, %arg4: memref<1x64xf32, #tpu.memory_space<vmem>>, %arg5: memref<1x1xf32, #tpu.memory_space<vmem>>, %arg6: memref<8x1xf32, #tpu.memory_space<vmem>>) attributes {dimension_semantics = [#tpu.dimension_semantics<parallel>], iteration_bounds = array<i64: 1>, scalar_prefetch = 0 : i64, scratch_operands = 0 : i64, tpu.core_type = #tpu.core_type<tc>, window_params = [{transform_indices = @transform_0, window_bounds = array<i64: 8, 128>}, {pipeline_mode = #tpu.pipeline_mode<synchronous>, transform_indices = @transform_1, window_bounds = array<i64: 128, 64>}, {pipeline_mode = #tpu.pipeline_mode<synchronous>, transform_indices = @transform_2, window_bounds = array<i64: 1, 64>}, {pipeline_mode = #tpu.pipeline_mode<synchronous>, transform_indices = @transform_3, window_bounds = array<i64: 1, 64>}, {pipeline_mode = #tpu.pipeline_mode<synchronous>, transform_indices = @transform_4, window_bounds = array<i64: 1, 1>}, {transform_indices = @transform_5, window_bounds = array<i64: 8, 1>}]} {
    %c0 = arith.constant 0 : index
    %c0_0 = arith.constant 0 : index
    %0 = vector.load %arg1[%c0, %c0_0] : memref<8x128xbf16, #tpu.memory_space<vmem>>, vector<8x128xbf16>
    %c0_1 = arith.constant 0 : index
    %c0_2 = arith.constant 0 : index
    %1 = vector.load %arg2[%c0_1, %c0_2] : memref<128x64xbf16, #tpu.memory_space<vmem>>, vector<128x64xbf16>
    %cst = arith.constant dense<0.000000e+00> : vector<8x64xf32>
    %2 = tpu.matmul %0, %1, %cst {dimension_numbers = #tpu.dot_dimension_numbers<[1], [0], [0], [1], [0, 0, 1, 1], [], []>} : vector<8x128xbf16>, vector<128x64xbf16>, vector<8x64xf32> -> vector<8x64xf32>
    %c0_3 = arith.constant 0 : index
    %c0_4 = arith.constant 0 : index
    %3 = vector.load %arg3[%c0_3, %c0_4] : memref<1x64xf32, #tpu.memory_space<vmem>>, vector<1x64xf32>
    %4 = vector.broadcast %3 : vector<1x64xf32> to vector<8x64xf32>
    %5 = arith.addf %2, %4 : vector<8x64xf32>
    %cst_5 = arith.constant 0.000000e+00 : f32
    %6 = vector.broadcast %cst_5 : f32 to vector<8x64xf32>
    %7 = arith.cmpf ogt, %5, %6 : vector<8x64xf32>
    %cst_6 = arith.constant 2.000000e-02 : f32
    %8 = vector.broadcast %cst_6 : f32 to vector<8x64xf32>
    %9 = arith.mulf %8, %5 : vector<8x64xf32>
    %10 = arith.select %7, %5, %9 : vector<8x64xi1>, vector<8x64xf32>
    %c0_7 = arith.constant 0 : index
    %c0_8 = arith.constant 0 : index
    %11 = vector.load %arg4[%c0_7, %c0_8] : memref<1x64xf32, #tpu.memory_space<vmem>>, vector<1x64xf32>
    %12 = vector.broadcast %11 : vector<1x64xf32> to vector<8x64xf32>
    %13 = arith.mulf %10, %12 : vector<8x64xf32>
    %cst_9 = arith.constant dense<0.000000e+00> : vector<8xf32>
    %14 = vector.multi_reduction <add>, %13, %cst_9 [1] : vector<8x64xf32> to vector<8xf32>
    %15 = vector.shape_cast %14 : vector<8xf32> to vector<8x1xf32>
    %c0_10 = arith.constant 0 : index
    %c0_11 = arith.constant 0 : index
    %16 = vector.load %arg5[%c0_10, %c0_11] : memref<1x1xf32, #tpu.memory_space<vmem>>, vector<1x1xf32>
    %17 = vector.broadcast %16 : vector<1x1xf32> to vector<8x1xf32>
    %18 = arith.addf %15, %17 : vector<8x1xf32>
    %19 = arith.negf %18 : vector<8x1xf32>
    %20 = math.exp %19 : vector<8x1xf32>
    %cst_12 = arith.constant 1.000000e+00 : f32
    %21 = vector.broadcast %cst_12 : f32 to vector<8x1xf32>
    %22 = arith.addf %21, %20 : vector<8x1xf32>
    %23 = arith.divf %21, %22 : vector<8x1xf32>
    %c0_13 = arith.constant 0 : index
    %c0_14 = arith.constant 0 : index
    %24 = vector.load %arg6[%c0_13, %c0_14] : memref<8x1xf32, #tpu.memory_space<vmem>>, vector<8x1xf32>
    tpu.vector_store %arg6[%c0_13, %c0_14], %23 {strides = array<i32>} : memref<8x1xf32, #tpu.memory_space<vmem>>, vector<8x1xf32>,
    return
  }
  func.func @transform_0(%arg0: i32) -> (i32, i32) {
    %c0_i32 = arith.constant 0 : i32
    %c0_i32_0 = arith.constant 0 : i32
    return %arg0, %c0_i32 : i32, i32
  }
  func.func @transform_1(%arg0: i32) -> (i32, i32) {
    %c0_i32 = arith.constant 0 : i32
    %c0_i32_0 = arith.constant 0 : i32
    %c0_i32_1 = arith.constant 0 : i32
    return %c0_i32, %c0_i32_0 : i32, i32
  }
  func.func @transform_2(%arg0: i32) -> (i32, i32) {
    %c0_i32 = arith.constant 0 : i32
    %c0_i32_0 = arith.constant 0 : i32
    %c0_i32_1 = arith.constant 0 : i32
    return %c0_i32, %c0_i32_0 : i32, i32
  }
  func.func @transform_3(%arg0: i32) -> (i32, i32) {
    %c0_i32 = arith.constant 0 : i32
    %c0_i32_0 = arith.constant 0 : i32
    %c0_i32_1 = arith.constant 0 : i32
    return %c0_i32, %c0_i32_0 : i32, i32
  }
  func.func @transform_4(%arg0: i32) -> (i32, i32) {
    %c0_i32 = arith.constant 0 : i32
    %c0_i32_0 = arith.constant 0 : i32
    %c0_i32_1 = arith.constant 0 : i32
    return %c0_i32, %c0_i32_0 : i32, i32
  }
  func.func @transform_5(%arg0: i32) -> (i32, i32) {
    %c0_i32 = arith.constant 0 : i32
    %c0_i32_0 = arith.constant 0 : i32
    return %arg0, %c0_i32 : i32, i32
  }
}

</mosaic_0001>

<llo_original>
// kernel: discriminator_forward.1
$region0: #{discriminator_forward.1}
  #allocation0 [shape = 'u32[]', space=smem, size = 0x4, offset = 0x4, fixed_abs, tag = 'smem constant byte address 0x4 - core index']
  #allocation1 [shape = 'u32[144,128]{1,0:T(1,128)}', space=vmem, size = 0x12000, scoped, tag = 'internal scratch']
  #allocation2 [shape = 'f32[1,1]{1,0:T(1,128)S(1)}', space=vmem, size = 0x200, scoped, tag = 'scoped memory for discriminator_forward.1']
  %s0 = inlined_call_operand.vmem [shape: bf16[8,128], index: 0, kind: input, shape index: {}]
  %s1 = inlined_call_operand.vmem [shape: bf16[128,64], index: 1, kind: input, shape index: {}]
  %s2 = inlined_call_operand.vmem [shape: f32[1,64], index: 2, kind: input, shape index: {}]
  %s3 = inlined_call_operand.vmem [shape: f32[1,64], index: 3, kind: input, shape index: {}]
  %s4 = inlined_call_operand.<no memory space> [shape: f32[1,1], index: 4, kind: input, shape index: {}]
  %s5 = inlined_call_operand.vmem [shape: f32[8,1], index: 5, kind: output, shape index: {}]
  %s6 = sld [smem:[#allocation0]]
  $region30: #{discriminator_forward.1} parent=0
    _
  %s8 = ssub.s32 1, %s6
  %s9 = scalar_select 0, %s8, %s6
  %v10 = vstv %s4
  %11 = vst [vmem:[#allocation2] sm:$0x1] %v10
  // Predicated region
  $region2: #{discriminator_forward.1} parent=0 // pred_check
    _
  $region3: #{discriminator_forward.1} parent=0 // pred_check_branch
    %13 = sbr.rel (0) target = $region5
  $region4: #{discriminator_forward.1} parent=0 // pred_region
    _
  $region5: #{discriminator_forward.1} parent=0 // pred_fallthru
    _
  // Predicated region
  $region6: #{discriminator_forward.1} parent=0 // pred_check
    _
  $region7: #{discriminator_forward.1} parent=0 // pred_check_branch
    %15 = sbr.rel (0) target = $region9
  $region8: #{discriminator_forward.1} parent=0 // pred_region
    _
  $region9: #{discriminator_forward.1} parent=0 // pred_fallthru
    _
  // Predicated region
  $region10: #{discriminator_forward.1} parent=0 // pred_check
    _
  $region11: #{discriminator_forward.1} parent=0 // pred_check_branch
    %17 = sbr.rel (0) target = $region13
  $region12: #{discriminator_forward.1} parent=0 // pred_region
    _
  $region13: #{discriminator_forward.1} parent=0 // pred_fallthru
    _
  // Predicated region
  $region14: #{discriminator_forward.1} parent=0 // pred_check
    _
  $region15: #{discriminator_forward.1} parent=0 // pred_check_branch
    %19 = sbr.rel (0) target = $region17
  $region16: #{discriminator_forward.1} parent=0 // pred_region
    _
  $region17: #{discriminator_forward.1} parent=0 // pred_fallthru
    _
  // Predicated region
  $region18: #{discriminator_forward.1} parent=0 // pred_check
    _
  $region19: #{discriminator_forward.1} parent=0 // pred_check_branch
    %21 = sbr.rel (0) target = $region21
  $region20: #{discriminator_forward.1} parent=0 // pred_region
    _
  $region21: #{discriminator_forward.1} parent=0 // pred_fallthru
    _
  %v23 = vld [vmem:[%s0] sm:$0xf]
  %v24 = vld [vmem:[%s1] sm:$0xf]
  %v25 = vld [vmem:[%s1 + $0x4] sm:$0xf]
  %v26 = vld [vmem:[%s1 + $0x8] sm:$0xf]
  %v27 = vld [vmem:[%s1 + $0xc] sm:$0xf]
  %v28 = vld [vmem:[%s1 + $0x10] sm:$0xf]
  %v29 = vld [vmem:[%s1 + $0x14] sm:$0xf]
  %v30 = vld [vmem:[%s1 + $0x18] sm:$0xf]
  %v31 = vld [vmem:[%s1 + $0x1c] sm:$0xf]
  %v32 = vld [vmem:[%s1 + $0x20] sm:$0xf]
  %v33 = vld [vmem:[%s1 + $0x24] sm:$0xf]
  %v34 = vld [vmem:[%s1 + $0x28] sm:$0xf]
  %v35 = vld [vmem:[%s1 + $0x2c] sm:$0xf]
  %v36 = vld [vmem:[%s1 + $0x30] sm:$0xf]
  %v37 = vld [vmem:[%s1 + $0x34] sm:$0xf]
  %v38 = vld [vmem:[%s1 + $0x38] sm:$0xf]
  %v39 = vld [vmem:[%s1 + $0x3c] sm:$0xf]
  %v40 = vld [vmem:[%s2] sm:$0x1]
  %v42 = vlaneseq
  %v43 = vshrl.u32 %v42, 7
  %v44 = vsub.s32 0, %v43
  %v45 = vrot.slane %v40, %v44
  %v63 = vunpack.c.l.b16 %v24
  %v64 = vunpack.c.l.b16 %v25
  %v65 = vunpack.c.l.b16 %v26
  %v66 = vunpack.c.l.b16 %v27
  %v67 = vunpack.c.l.b16 %v28
  %v68 = vunpack.c.l.b16 %v29
  %v69 = vunpack.c.l.b16 %v30
  %v70 = vunpack.c.l.b16 %v31
  %v71 = vunpack.c.l.b16 %v32
  %v72 = vunpack.c.l.b16 %v33
  %v73 = vunpack.c.l.b16 %v34
  %v74 = vunpack.c.l.b16 %v35
  %v75 = vunpack.c.l.b16 %v36
  %v76 = vunpack.c.l.b16 %v37
  %v77 = vunpack.c.l.b16 %v38
  %v78 = vunpack.c.l.b16 %v39
  %v79 = vpack.c.b16 %v64, %v63
  %v80 = vpack.c.b16 %v66, %v65
  %v81 = vpack.c.b16 %v68, %v67
  %v82 = vpack.c.b16 %v70, %v69
  %v83 = vpack.c.b16 %v72, %v71
  %v84 = vpack.c.b16 %v74, %v73
  %v85 = vpack.c.b16 %v76, %v75
  %v86 = vpack.c.b16 %v78, %v77
  %95 = vmatprep.subr.bf16.mxu0 0
  %96 = vmatpush1.bf16.msra.mxu0 %v86
  %97 = vmatprep.subr.bf16.mxu0 0
  %98 = vmatpush1.bf16.msra.mxu0 %v85
  %99 = vmatprep.subr.bf16.mxu0 0
  %100 = vmatpush1.bf16.msra.mxu0 %v84
  %101 = vmatprep.subr.bf16.mxu0 0
  %102 = vmatpush1.bf16.msra.mxu0 %v83
  %103 = vmatprep.subr.bf16.mxu0 0
  %104 = vmatpush1.bf16.msra.mxu0 %v82
  %105 = vmatprep.subr.bf16.mxu0 0
  %106 = vmatpush1.bf16.msra.mxu0 %v81
  %107 = vmatprep.subr.bf16.mxu0 0
  %108 = vmatpush1.bf16.msra.mxu0 %v80
  %109 = vmatprep.subr.bf16.mxu0 0
  %110 = vmatpush1.bf16.msra.mxu0 %v79
  %111 = vmatprep.subr.bf16.mxu0 0
  %112 = vmatpush2.bf16.msra.mxu0 0
  %113 = vmatprep.subr.bf16.mxu0 0
  %114 = vmatpush2.bf16.msra.mxu0 0
  %115 = vmatprep.subr.bf16.mxu0 0
  %116 = vmatpush2.bf16.msra.mxu0 0
  %117 = vmatprep.subr.bf16.mxu0 0
  %118 = vmatpush2.bf16.msra.mxu0 0
  %119 = vmatprep.subr.bf16.mxu0 0
  %120 = vmatpush2.bf16.msra.mxu0 0
  %121 = vmatprep.subr.bf16.mxu0 0
  %122 = vmatpush2.bf16.msra.mxu0 0
  %123 = vmatprep.subr.bf16.mxu0 0
  %124 = vmatpush2.bf16.msra.mxu0 0
  %125 = vmatprep.subr.bf16.mxu0 0
  %126 = vmatpush2.bf16.msra.mxu0 0
  %127 = vmatprep.mubr.bf16.mxu0 0
  %128 = vmatmul.mubr.bf16.gmra.mxu0 %v23
  %v129 = vpop.f32.mrf.mxu0
  %v130 = vadd.f32 %v45, %v129
  %v131 = vpop.f32.mrf.mxu0
  %v132 = vpop.f32.mrf.mxu0
  %v133 = vpop.f32.mrf.mxu0
  %134 = vdwg.mxu0
  %vm135 = vcmp.gt.f32.partialorder %v130, 0.0
  %v136 = vmul.f32 %v130, 0.02
  %v137 = vsel %vm135, %v130, %v136
  %v138 = vld [vmem:[%s3] sm:$0x1]
  %v140 = vlaneseq
  %v141 = vshrl.u32 %v140, 7
  %v142 = vsub.s32 0, %v141
  %v143 = vrot.slane %v138, %v142
  %v145 = vmul.f32 %v137, %v143
  %vm146 = vcmask 523264
  %v147 = vsel %vm146, %v145, 0.0
  %148 = vadd.xlane.f32.xlu0 %v147
  %v149 = vpop.xlane.xlu0 %148
  %v150 = vld [vmem:[#allocation2] sm:$0x1]
  %v152 = vlaneseq
  %v153 = vshrl.u32 %v152, 7
  %v154 = vsub.s32 0, %v153
  %v155 = vrot.slane %v150, %v154
  %v157 = vadd.f32 %v149, %v155
  %v158 = vxor.u32 %v157, 2147483648
  %v159 = vmul.f32 %v158, 1.442695
  %v160 = vpow.pop %v159
  %v161 = vadd.f32 %v160, 1.0
  %v162 = vrcp.pop %v161
  %v163 = vmul.f32 1.0, %v162
  %vm164 = vcmask 7168
  %165 = vst.msk [vmem:[%s5] sm:$0xff] %vm164, %v163
  // Predicated region
  $region22: #{discriminator_forward.1} parent=0 // pred_check
    _
  $region23: #{discriminator_forward.1} parent=0 // pred_check_branch
    %167 = sbr.rel (0) target = $region25
  $region24: #{discriminator_forward.1} parent=0 // pred_region
    _
  $region25: #{discriminator_forward.1} parent=0 // pred_fallthru
    _
  // Predicated region
  $region26: #{discriminator_forward.1} parent=0 // pred_check
    _
  $region27: #{discriminator_forward.1} parent=0 // pred_check_branch
    %169 = sbr.rel (0) target = $region29
  $region28: #{discriminator_forward.1} parent=0 // pred_region
    _
  $region29: #{discriminator_forward.1} parent=0 // pred_fallthru
    _

</llo_original>
